<compile_context>
chip_gen: v6e
topology: v6e:2x2x1
jax: 0.10.0
libtpu: 0.0.40
codegen_flags: <defaults>
</compile_context>

<pallas_src>
import functools

import jax
import jax.numpy as jnp
from jax import lax
from jax.experimental import pallas as pl
from jax.experimental.pallas import tpu as pltpu

_VMEM_LIMIT = 48 * 1024 * 1024  # headroom below v7x's 64 MiB physical VMEM


# ----------------------------- Linear kernels --------------------------------

def _linear_kernel(x_ref, w_ref, o_ref):
    # x: (tm, Din), w: (Din, Dout) pre-transposed, o: (tm, Dout)
    o_ref[...] = jnp.dot(
        x_ref[...], w_ref[...], preferred_element_type=jnp.float32
    ).astype(o_ref.dtype)


def _linear_bias_kernel(x_ref, w_ref, b_ref, o_ref):
    acc = jnp.dot(x_ref[...], w_ref[...], preferred_element_type=jnp.float32)
    o_ref[...] = (acc + b_ref[...]).astype(o_ref.dtype)


def linear_pallas(x2d, w_t, bias=None, *, out_dtype=None, row_block=256):
    """x2d: (R, Din); w_t: (Din, Dout) PRE-transposed; bias: (Dout,) f32 or None."""
    R, Din = x2d.shape
    Dout = w_t.shape[1]
    out_dtype = x2d.dtype if out_dtype is None else out_dtype
    tm = min(row_block, R)  # tm == R (full) or a multiple of 8; uneven last block is OK
    grid = (pl.cdiv(R, tm),)

    in_specs = [
        pl.BlockSpec((tm, Din), lambda i: (i, 0)),
        pl.BlockSpec((Din, Dout), lambda i: (0, 0)),
    ]
    args = (x2d, w_t)
    kernel = _linear_kernel
    if bias is not None:
        in_specs.append(pl.BlockSpec((1, Dout), lambda i: (0, 0)))
        args = (x2d, w_t, bias.reshape(1, Dout))
        kernel = _linear_bias_kernel

    return pl.pallas_call(
        kernel,
        out_shape=jax.ShapeDtypeStruct((R, Dout), out_dtype),
        grid=grid,
        in_specs=in_specs,
        out_specs=pl.BlockSpec((tm, Dout), lambda i: (i, 0)),
        compiler_params=pltpu.CompilerParams(
            dimension_semantics=("parallel",),
            vmem_limit_bytes=_VMEM_LIMIT,
        ),
    )(*args)


# ----------------------------- Attention kernel ------------------------------

def _attn_kernel(q_ref, kv_ref, o_ref, *, heads, d_head, scale):
    # q_ref: (tq, inner), kv_ref: (M, 2*inner), o_ref: (tq, inner); inner = heads*d_head.
    # Heads are processed inside the kernel -> lane-dense (tq, inner) output slab.
    inner = heads * d_head
    for h in range(heads):  # static unroll; heads is small
        hs = pl.ds(h * d_head, d_head)
        q = q_ref[:, hs] * scale                       # fold 1/sqrt(d) into the small q tile
        k = kv_ref[:, hs]
        v = kv_ref[:, pl.ds(inner + h * d_head, d_head)]
        # QK^T without materializing a transposed K tile (contract over d).
        s = lax.dot_general(q, k, (((1,), (1,)), ((), ())),
                            preferred_element_type=jnp.float32)
        m = jnp.max(s, axis=-1, keepdims=True)
        p = jnp.exp(s - m)
        p = p * pl.reciprocal(jnp.sum(p, axis=-1, keepdims=True), approx=True)
        o_ref[:, hs] = jnp.dot(
            p.astype(v.dtype), v, preferred_element_type=jnp.float32
        ).astype(o_ref.dtype)


def attention_pallas(q, kv, *, heads, d_head, scale, q_block=256):
    """q: (B, N, inner); kv: (B, M, 2*inner) (K and V fused) -> (B, N, inner)."""
    B, N, inner = q.shape
    M, kv_width = kv.shape[1], kv.shape[2]
    tq = min(q_block, N)  # query tiling keeps (tq, M) scores within VMEM budget
    kernel = functools.partial(_attn_kernel, heads=heads, d_head=d_head, scale=scale)
    # TODO(synk): for very large M add an 'arbitrary' KV grid axis with online softmax
    # (running m/l accumulators + pl.when init/finalize), esp. for v7x's 64 MiB VMEM.
    return pl.pallas_call(
        kernel,
        out_shape=jax.ShapeDtypeStruct((B, N, inner), q.dtype),
        grid=(B, pl.cdiv(N, tq)),
        in_specs=[
            pl.BlockSpec((None, tq, inner), lambda b, i: (b, i, 0)),
            pl.BlockSpec((None, M, kv_width), lambda b, i: (b, 0, 0)),
        ],
        out_specs=pl.BlockSpec((None, tq, inner), lambda b, i: (b, i, 0)),
        compiler_params=pltpu.CompilerParams(
            dimension_semantics=("parallel", "parallel"),
            vmem_limit_bytes=_VMEM_LIMIT,
        ),
    )(q, kv)


# ----------------------------- Module wrapper ---------------------------------

def init_cross_attention_params(key, query_dim, context_dim, heads, d_head):
    """nn.Linear-style init; stored pre-transposed (Din, Dout) with K/V fused."""
    inner_dim = heads * d_head
    kq, kk, kv, ko, kb = jax.random.split(key, 5)

    def lin_w(k, out_f, in_f):
        bound = 1.0 / jnp.sqrt(jnp.float32(in_f))
        return jax.random.uniform(k, (out_f, in_f), jnp.float32, -bound, bound)

    wq = lin_w(kq, inner_dim, query_dim)     # to_q (no bias)
    wk = lin_w(kk, inner_dim, context_dim)   # to_k (no bias)
    wv = lin_w(kv, inner_dim, context_dim)   # to_v (no bias)
    wo = lin_w(ko, query_dim, inner_dim)     # to_out[0]
    bound_o = 1.0 / jnp.sqrt(jnp.float32(inner_dim))
    bo = jax.random.uniform(kb, (query_dim,), jnp.float32, -bound_o, bound_o)
    return {
        "wq_t": wq.T,                                    # (query_dim, inner)
        "wkv_t": jnp.concatenate([wk.T, wv.T], axis=1),  # (context_dim, 2*inner)
        "wo_t": wo.T,                                    # (inner, query_dim)
        "bo": bo,                                        # (query_dim,)
    }


def cross_attention_forward(params, x, context=None, mask=None, heads=8,
                            att_steps=1, compute_dtype=jnp.bfloat16,
                            q_block=256, row_block=256):
    # mask is accepted but unused (matches PyTorch forward); Dropout(0.0) = identity;
    # att_steps chunking is a no-op restructuring of per-(b,h) attention.
    del mask, att_steps
    if context is None:
        context = x
    B, N, Dq = x.shape
    M = context.shape[1]
    inner = params["wq_t"].shape[1]
    d_head = inner // heads
    scale = float(d_head) ** (-0.5)

    xc = x.astype(compute_dtype).reshape(B * N, Dq)
    cc = context.astype(compute_dtype).reshape(B * M, -1)
    wq_t = params["wq_t"].astype(compute_dtype)
    wkv_t = params["wkv_t"].astype(compute_dtype)
    wo_t = params["wo_t"].astype(compute_dtype)

    # Projections: q, and fused K|V in a single pass over context.
    q = linear_pallas(xc, wq_t, out_dtype=compute_dtype,
                      row_block=row_block).reshape(B, N, inner)
    kv = linear_pallas(cc, wkv_t, out_dtype=compute_dtype,
                       row_block=row_block).reshape(B, M, 2 * inner)

    # Attention: heads handled inside the kernel (lane-dense output), f32 softmax.
    o = attention_pallas(q, kv, heads=heads, d_head=d_head, scale=scale,
                         q_block=q_block)

    # to_out: Linear(inner, query_dim) + bias; Dropout identity at inference.
    out = linear_pallas(o.reshape(B * N, inner), wo_t, bias=params["bo"],
                        out_dtype=jnp.float32, row_block=row_block)
    return out.reshape(B, N, Dq)


# ----------------------------- Pure-JAX reference ------------------------------

def cross_attention_reference(params, x, context, heads):
    B, N, _ = x.shape
    M = context.shape[1]
    inner = params["wq_t"].shape[1]
    d_head = inner // heads
    scale = float(d_head) ** (-0.5)
    q = x @ params["wq_t"]
    k = context @ params["wkv_t"][:, :inner]
    v = context @ params["wkv_t"][:, inner:]

    def sh(t, L):
        return (t.reshape(B, L, heads, d_head)
                 .transpose(0, 2, 1, 3)
                 .reshape(B * heads, L, d_head))

    qh, kh, vh = sh(q, N), sh(k, M), sh(v, M)
    s = jnp.einsum("bid,bjd->bij", qh, kh) * scale
    p = jax.nn.softmax(s, axis=-1)
    o = jnp.einsum("bij,bjd->bid", p, vh)
    o = o.reshape(B, heads, N, d_head).transpose(0, 2, 1, 3).reshape(B, N, inner)
    return o @ params["wo_t"] + params["bo"]


# ---------------------------------- Main ---------------------------------------

if __name__ == "__main__":
    B, N, M = 2, 16, 8
    query_dim, context_dim = 32, 24
    heads, d_head = 2, 64  # inner_dim = 128 -> lane-dense blocks

    key = jax.random.PRNGKey(0)
    kx, kc, kp = jax.random.split(key, 3)
    x = jax.random.normal(kx, (B, N, query_dim), jnp.float32)
    context = jax.random.normal(kc, (B, M, context_dim), jnp.float32)
    params = init_cross_attention_params(kp, query_dim, context_dim, heads, d_head)

    ref = cross_attention_reference(params, x, context, heads)

    # f32 MXU feed (tight check; approx reciprocal in softmax).
    out_f32 = cross_attention_forward(params, x, context=context, heads=heads,
                                      compute_dtype=jnp.float32)
    out_f32 = jax.block_until_ready(out_f32)
    assert out_f32.shape == (B, N, query_dim)
    assert jnp.allclose(out_f32, ref, atol=2e-3, rtol=2e-3), "f32 path mismatch vs reference"

    # bf16 MXU feed (fast path on v6e/v7x): f32 accumulation + f32 softmax.
    out_bf16 = cross_attention_forward(params, x, context=context, heads=heads,
                                       compute_dtype=jnp.bfloat16)
    out_bf16 = jax.block_until_ready(out_bf16)
    assert jnp.allclose(out_bf16, ref, atol=5e-2, rtol=5e-2), "bf16 path mismatch vs reference"

    print("KERNEL_OK")
</pallas_src>

<mosaic_0001>
module attributes {stable_mosaic.version = 11 : i64} {
  func.func @_linear_kernel(%arg0: i32, %arg1: memref<32x32xf32, #tpu.memory_space<vmem>>, %arg2: memref<32x128xf32, #tpu.memory_space<vmem>>, %arg3: memref<32x128xf32, #tpu.memory_space<vmem>>) attributes {dimension_semantics = [#tpu.dimension_semantics<parallel>], iteration_bounds = array<i64: 1>, scalar_prefetch = 0 : i64, scratch_operands = 0 : i64, tpu.core_type = #tpu.core_type<tc>, window_params = [{transform_indices = @transform_0, window_bounds = array<i64: 32, 32>}, {pipeline_mode = #tpu.pipeline_mode<synchronous>, transform_indices = @transform_1, window_bounds = array<i64: 32, 128>}, {transform_indices = @transform_2, window_bounds = array<i64: 32, 128>}]} {
    %c0 = arith.constant 0 : index
    %c0_0 = arith.constant 0 : index
    %0 = vector.load %arg1[%c0, %c0_0] : memref<32x32xf32, #tpu.memory_space<vmem>>, vector<32x32xf32>
    %c0_1 = arith.constant 0 : index
    %c0_2 = arith.constant 0 : index
    %1 = vector.load %arg2[%c0_1, %c0_2] : memref<32x128xf32, #tpu.memory_space<vmem>>, vector<32x128xf32>
    %cst = arith.constant dense<0.000000e+00> : vector<32x128xf32>
    %2 = tpu.matmul %0, %1, %cst {dimension_numbers = #tpu.dot_dimension_numbers<[1], [0], [0], [1], [0, 0, 1, 1], [], []>} : vector<32x32xf32>, vector<32x128xf32>, vector<32x128xf32> -> vector<32x128xf32>
    %c0_3 = arith.constant 0 : index
    %c0_4 = arith.constant 0 : index
    %3 = vector.load %arg3[%c0_3, %c0_4] : memref<32x128xf32, #tpu.memory_space<vmem>>, vector<32x128xf32>
    tpu.vector_store %arg3[%c0_3, %c0_4], %2 {strides = array<i32>} : memref<32x128xf32, #tpu.memory_space<vmem>>, vector<32x128xf32>,
    return
  }
  func.func @transform_0(%arg0: i32) -> (i32, i32) {
    %c0_i32 = arith.constant 0 : i32
    %c0_i32_0 = arith.constant 0 : i32
    return %arg0, %c0_i32 : i32, i32
  }
  func.func @transform_1(%arg0: i32) -> (i32, i32) {
    %c0_i32 = arith.constant 0 : i32
    %c0_i32_0 = arith.constant 0 : i32
    %c0_i32_1 = arith.constant 0 : i32
    return %c0_i32, %c0_i32_0 : i32, i32
  }
  func.func @transform_2(%arg0: i32) -> (i32, i32) {
    %c0_i32 = arith.constant 0 : i32
    %c0_i32_0 = arith.constant 0 : i32
    return %arg0, %c0_i32 : i32, i32
  }
}

</mosaic_0001>

<llo_original>
// kernel: tpu_custom_call.1
$region0: #{tpu_custom_call.1}
  #allocation0 [shape = 'u32[]', space=smem, size = 0x4, offset = 0x4, fixed_abs, tag = 'smem constant byte address 0x4 - core index']
  #allocation1 [shape = 'u32[144,128]{1,0:T(1,128)}', space=vmem, size = 0x12000, scoped, tag = 'internal scratch']
  %s0 = inlined_call_operand.hbm [shape: f32[32,32], index: 0, kind: input, shape index: {}]
  %s1 = inlined_call_operand.hbm [shape: f32[32,128], index: 1, kind: input, shape index: {}]
  %s2 = inlined_call_operand.hbm [shape: f32[32,128], index: 2, kind: output, shape index: {}]
  %s3 = sld [smem:[#allocation0]]
  $region26: #{tpu_custom_call.1} parent=0
    _
  %s5 = ssub.s32 1, %s3
  %s6 = scalar_select 0, %s5, %s3
  $region1: #{tpu_custom_call.1} parent=0
    #allocation2 [shape = 'u8[16384]{0}', space=vmem, size = 0x4000, scoped, tag = 'input window, operand 0, single buffered']
    #allocation3 [shape = 's32[1]{0}', space=sflag, size = 0x4, scoped, tag = 'scoped memory for tpu_custom_call.1']
    #allocation4 [shape = 's32[1]{0}', space=sflag, size = 0x4, scoped, tag = 'scoped memory for tpu_custom_call.1']
    #allocation5 [shape = 'u8[16384]{0}', space=vmem, size = 0x4000, scoped, tag = 'input window, operand 1, single buffered']
    #allocation6 [shape = 's32[1]{0}', space=sflag, size = 0x4, scoped, tag = 'scoped memory for tpu_custom_call.1']
    #allocation7 [shape = 'u8[16384]{0}', space=vmem, size = 0x4000, scoped, tag = 'output window, operand 0, single buffered']
    %7 = vsyncpa [#allocation3], 0
    %8 = vsyncpa [#allocation6], 0
    %9 = vsyncpa [#allocation4], 0
    // Predicated region
    $region2: #{tpu_custom_call.1} parent=1 // pred_check
      _
    $region3: #{tpu_custom_call.1} parent=1 // pred_check_branch
      %11 = sbr.rel (0) target = $region5
    $region4: #{tpu_custom_call.1} parent=1 // pred_region
      %s13 = ssub.s32 512, 512
      %14 = vsyncadd [#allocation3], %s13
      %s15 = sshll.u32 [#allocation2], 4
      %s16 = int_to_ptr.vmem [resolvable:$true] %s15
      %21 = dma.hbm_to_vmem [thread:$0]  %s0, 512, %s16, [#allocation3], 128, 128, 8
    $region5: #{tpu_custom_call.1} parent=1 // pred_fallthru
      _
    // Predicated region
    $region6: #{tpu_custom_call.1} parent=1 // pred_check
      _
    $region7: #{tpu_custom_call.1} parent=1 // pred_check_branch
      %23 = sbr.rel (0) target = $region9
    $region8: #{tpu_custom_call.1} parent=1 // pred_region
      %s25 = ssub.s32 512, 512
      %26 = vsyncadd [#allocation6], %s25
      %s27 = sshll.u32 [#allocation5], 4
      %s28 = int_to_ptr.vmem [resolvable:$true] %s27
      %33 = dma.hbm_to_vmem [thread:$0]  %s1, 512, %s28, [#allocation6], 128, 128, 8
    $region9: #{tpu_custom_call.1} parent=1 // pred_fallthru
      _
    // Predicated region
    $region10: #{tpu_custom_call.1} parent=1 // pred_check
      _
    $region11: #{tpu_custom_call.1} parent=1 // pred_check_branch
      %35 = sbr.rel (0) target = $region13
    $region12: #{tpu_custom_call.1} parent=1 // pred_region
      %36 = dma.done [#allocation3], 512
    $region13: #{tpu_custom_call.1} parent=1 // pred_fallthru
      _
    // Predicated region
    $region14: #{tpu_custom_call.1} parent=1 // pred_check
      _
    $region15: #{tpu_custom_call.1} parent=1 // pred_check_branch
      %38 = sbr.rel (0) target = $region17
    $region16: #{tpu_custom_call.1} parent=1 // pred_region
      %39 = dma.done [#allocation6], 512
    $region17: #{tpu_custom_call.1} parent=1 // pred_fallthru
      _
    %v40 = vld [vmem:[#allocation2] sm:$0xff]
    %v41 = vld [vmem:[#allocation2 + $0x8] sm:$0xff]
    %v42 = vld [vmem:[#allocation2 + $0x10] sm:$0xff]
    %v43 = vld [vmem:[#allocation2 + $0x18] sm:$0xff]
    %v44 = vld [vmem:[#allocation5] sm:$0xff]
    %v45 = vld [vmem:[#allocation5 + $0x8] sm:$0xff]
    %v46 = vld [vmem:[#allocation5 + $0x10] sm:$0xff]
    %v47 = vld [vmem:[#allocation5 + $0x18] sm:$0xff]
    %vm48 = vcmask 261120
    %v50 = vsel %vm48, %v40, 0
    %v53 = vsel %vm48, %v41, 0
    %v56 = vsel %vm48, %v42, 0
    %v59 = vsel %vm48, %v43, 0
    %61 = vmatprep.subr.mxu0 0.0
    %62 = vmatpush1.msra.mxu0 0.0
    %63 = vmatprep.subr.mxu0 0.0
    %64 = vmatpush1.msra.mxu0 0.0
    %65 = vmatprep.subr.mxu0 0.0
    %66 = vmatpush1.msra.mxu0 0.0
    %67 = vmatprep.subr.mxu0 0.0
    %68 = vmatpush1.msra.mxu0 0.0
    %69 = vmatprep.subr.mxu0 0.0
    %70 = vmatpush1.msra.mxu0 0.0
    %71 = vmatprep.subr.mxu0 0.0
    %72 = vmatpush1.msra.mxu0 0.0
    %73 = vmatprep.subr.mxu0 0.0
    %74 = vmatpush1.msra.mxu0 0.0
    %75 = vmatprep.subr.mxu0 0.0
    %76 = vmatpush1.msra.mxu0 0.0
    %77 = vmatprep.subr.mxu0 0.0
    %78 = vmatpush1.msra.mxu0 0.0
    %79 = vmatprep.subr.mxu0 0.0
    %80 = vmatpush1.msra.mxu0 0.0
    %81 = vmatprep.subr.mxu0 0.0
    %82 = vmatpush1.msra.mxu0 0.0
    %83 = vmatprep.subr.mxu0 0.0
    %84 = vmatpush1.msra.mxu0 0.0
    %85 = vmatprep.subr.mxu0 0.0
    %86 = vmatpush1.msra.mxu0 %v47
    %87 = vmatprep.subr.mxu0 0.0
    %88 = vmatpush1.msra.mxu0 %v46
    %89 = vmatprep.subr.mxu0 0.0
    %90 = vmatpush1.msra.mxu0 %v45
    %91 = vmatprep.subr.mxu0 0.0
    %92 = vmatpush1.msra.mxu0 %v44
    %93 = vmatprep.subr.mxu0 0.0
    %94 = vmatpush2.msra.mxu0 0.0
    %95 = vmatprep.subr.mxu0 0.0
    %96 = vmatpush2.msra.mxu0 0.0
    %97 = vmatprep.subr.mxu0 0.0
    %98 = vmatpush2.msra.mxu0 0.0
    %99 = vmatprep.subr.mxu0 0.0
    %100 = vmatpush2.msra.mxu0 0.0
    %101 = vmatprep.subr.mxu0 0.0
    %102 = vmatpush2.msra.mxu0 0.0
    %103 = vmatprep.subr.mxu0 0.0
    %104 = vmatpush2.msra.mxu0 0.0
    %105 = vmatprep.subr.mxu0 0.0
    %106 = vmatpush2.msra.mxu0 0.0
    %107 = vmatprep.subr.mxu0 0.0
    %108 = vmatpush2.msra.mxu0 0.0
    %109 = vmatprep.subr.mxu0 0.0
    %110 = vmatpush2.msra.mxu0 0.0
    %111 = vmatprep.subr.mxu0 0.0
    %112 = vmatpush2.msra.mxu0 0.0
    %113 = vmatprep.subr.mxu0 0.0
    %114 = vmatpush2.msra.mxu0 0.0
    %115 = vmatprep.subr.mxu0 0.0
    %116 = vmatpush2.msra.mxu0 0.0
    %117 = vmatprep.subr.mxu0 0.0
    %118 = vmatpush2.msra.mxu0 0.0
    %119 = vmatprep.subr.mxu0 0.0
    %120 = vmatpush2.msra.mxu0 0.0
    %121 = vmatprep.subr.mxu0 0.0
    %122 = vmatpush2.msra.mxu0 0.0
    %123 = vmatprep.subr.mxu0 0.0
    %124 = vmatpush2.msra.mxu0 0.0
    %125 = vmatprep.mubr.f32.mxu0 0.0
    %126 = vmatmul.mubr.f32.gmra.mxu0 %v50
    %v127 = vpop.f32.mrf.mxu0
    %v128 = vadd.f32 0.0, %v127
    %v129 = vpop.f32.mrf.mxu0
    %130 = vmatprep.mubr.f32.mxu0 0.0
    %131 = vmatmul.mubr.f32.gmra.mxu0 %v53
    %v132 = vpop.f32.mrf.mxu0
    %v133 = vadd.f32 0.0, %v132
    %v134 = vpop.f32.mrf.mxu0
    %135 = vmatprep.mubr.f32.mxu0 0.0
    %136 = vmatmul.mubr.f32.gmra.mxu0 %v56
    %v137 = vpop.f32.mrf.mxu0
    %v138 = vadd.f32 0.0, %v137
    %v139 = vpop.f32.mrf.mxu0
    %140 = vmatprep.mubr.f32.mxu0 0.0
    %141 = vmatmul.mubr.f32.gmra.mxu0 %v59
    %v142 = vpop.f32.mrf.mxu0
    %v143 = vadd.f32 0.0, %v142
    %v144 = vpop.f32.mrf.mxu0
    %145 = vdwg.mxu0
    %146 = vst [vmem:[#allocation7] sm:$0xff] %v128
    %147 = vst [vmem:[#allocation7 + $0x8] sm:$0xff] %v133
    %148 = vst [vmem:[#allocation7 + $0x10] sm:$0xff] %v138
    %149 = vst [vmem:[#allocation7 + $0x18] sm:$0xff] %v143
    // Predicated region
    $region18: #{tpu_custom_call.1} parent=1 // pred_check
      _
    $region19: #{tpu_custom_call.1} parent=1 // pred_check_branch
      %151 = sbr.rel (0) target = $region21
    $region20: #{tpu_custom_call.1} parent=1 // pred_region
      %s153 = ssub.s32 512, 512
      %154 = vsyncadd [#allocation4], %s153
      %s155 = sshll.u32 [#allocation7], 4
      %s156 = int_to_ptr.vmem [resolvable:$true] %s155
      %161 = dma.vmem_to_hbm [thread:$0]  %s156, 512, %s2, [#allocation4], 128, 128, 8
    $region21: #{tpu_custom_call.1} parent=1 // pred_fallthru
      _
    // Predicated region
    $region22: #{tpu_custom_call.1} parent=1 // pred_check
      _
    $region23: #{tpu_custom_call.1} parent=1 // pred_check_branch
      %163 = sbr.rel (0) target = $region25
    $region24: #{tpu_custom_call.1} parent=1 // pred_region
      %164 = dma.done [#allocation4], 512
    $region25: #{tpu_custom_call.1} parent=1 // pred_fallthru
      _
    %165 = vsyncpa [#allocation3], 1
    %166 = vsyncpa [#allocation6], 1
    %167 = vsyncpa [#allocation4], 1

</llo_original>
